<compile_context>
chip_gen: v7x
topology: tpu7x:2x2x1
jax: 0.10.0
libtpu: 0.0.40
codegen_flags: <defaults>
</compile_context>

<pallas_src>
import functools
import math

import jax
import jax.numpy as jnp
from jax import lax
from jax.experimental import pallas as pl
from jax.experimental.pallas import tpu as pltpu


# ------------------------------- helpers -----------------------------------

def _tile_size(total, target):
    """Largest multiple-of-8 divisor of `total` that is <= target (or `total`)."""
    if total <= target:
        return total
    t = (target // 8) * 8
    while t >= 8:
        if total % t == 0:
            return t
        t -= 8
    return total  # no aligned divisor -> fall back to the full extent


_VMEM_LIMIT = 32 * 1024 * 1024  # explicit scoped-VMEM budget (safe on v5e/v6e/v7x)


# --------------------------- linear + relu kernel ---------------------------

def _linear_relu_kernel(x_ref, w_ref, b_ref, o_ref):
    # x_ref: (TM, F_in); w_ref: (F_out, F_in) [PyTorch nn.Linear layout]; b_ref: (1, F_out)
    # Contract dim 1 of both operands -> no in-kernel w.T / XLU transpose.
    y = lax.dot_general(
        x_ref[...], w_ref[...],
        dimension_numbers=(((1,), (1,)), ((), ())),
        preferred_element_type=jnp.float32,
    )
    y = y + b_ref[...]  # (TM, F_out) + (1, F_out)
    o_ref[...] = jnp.maximum(y, 0.0).astype(o_ref.dtype)


def linear_relu(x, w, b, *, row_tile=256):
    """y = relu(x @ w.T + b); x: (B, S, F_in), w: (F_out, F_in), b: (1, F_out)."""
    B, S, F_in = x.shape
    F_out = w.shape[0]
    M = B * S
    x2 = x.reshape(M, F_in)           # free (contiguous) reshape, no transpose
    TM = _tile_size(M, row_tile)
    grid = (M // TM,)

    cost = pl.CostEstimate(
        flops=2 * M * F_in * F_out,
        transcendentals=0,
        bytes_accessed=4 * (M * F_in + F_out * F_in + F_out + M * F_out),
    )
    out = pl.pallas_call(
        _linear_relu_kernel,
        out_shape=jax.ShapeDtypeStruct((M, F_out), x.dtype),
        grid=grid,
        in_specs=[
            pl.BlockSpec((TM, F_in), lambda i: (i, 0)),
            pl.BlockSpec((F_out, F_in), lambda i: (0, 0)),
            pl.BlockSpec((1, F_out), lambda i: (0, 0)),
        ],
        out_specs=pl.BlockSpec((TM, F_out), lambda i: (i, 0)),
        compiler_params=pltpu.CompilerParams(
            dimension_semantics=("parallel",),
            vmem_limit_bytes=_VMEM_LIMIT,
        ),
        cost_estimate=cost,
    )(x2, w, b)
    return out.reshape(B, S, F_out)


# ---------- fused scaled-dot-product attention + output projection ----------

def _sdpa_oproj_kernel(q_ref, k_ref, v_ref, wo_ref, bo_ref, y_ref, attn_ref,
                       acc_ref, *, scale):
    # q_ref: (1, TQ, D); k_ref/v_ref: (1, S, D); wo_ref: (F, D) [head-h input slice
    # of the PyTorch (F_out, F_in) weight]; bo_ref: (1, F)
    # y_ref: (1, TQ, F); attn_ref: (1, 1, TQ, S); acc_ref: (TQ, F) f32 scratch.
    h = pl.program_id(2)

    @pl.when(h == 0)
    def _():
        acc_ref[...] = jnp.zeros_like(acc_ref)

    q = q_ref[0]
    k = k_ref[0]
    v = v_ref[0]

    # scores = q @ k.T / sqrt(D)  (contract last dims -> no in-kernel transpose)
    s = lax.dot_general(
        q, k, dimension_numbers=(((1,), (1,)), ((), ())),
        preferred_element_type=jnp.float32,
    ) * jnp.float32(scale)
    # numerically-stable softmax over the key axis
    s = s - jnp.max(s, axis=-1, keepdims=True)
    p = jnp.exp(s)
    attn = p * pl.reciprocal(jnp.sum(p, axis=-1, keepdims=True), approx=True)
    attn_ref[0, 0] = attn.astype(attn_ref.dtype)

    # per-head attention context (TQ, D)
    ctx = jnp.dot(attn.astype(v.dtype), v, preferred_element_type=jnp.float32)

    # fused output projection partial: ctx_h @ Wo[:, h*D:(h+1)*D].T -> (TQ, F)
    acc_ref[...] += lax.dot_general(
        ctx, wo_ref[...], dimension_numbers=(((1,), (1,)), ((), ())),
        preferred_element_type=jnp.float32,
    )

    @pl.when(h == pl.num_programs(2) - 1)
    def _():
        y = acc_ref[...] + bo_ref[...]
        y_ref[0] = jnp.maximum(y, 0.0).astype(y_ref.dtype)


def sdpa_output_proj(qp, kp, vp, wo, bo, head_num, *, q_tile=256):
    """Fused multi-head SDPA + head-merge + output projection (+bias+ReLU).

    qp/kp/vp: (B, S, F) with heads as contiguous D = F // head_num column windows.
    wo: (F, F) PyTorch layout; bo: (1, F).
    Returns: y (B, S, F), attn (B, H, S, S).
    """
    B, S, F = qp.shape
    D = F // head_num
    TQ = _tile_size(S, q_tile)
    n_q = S // TQ
    scale = 1.0 / math.sqrt(D)

    cost = pl.CostEstimate(
        flops=4 * B * head_num * S * S * D + 2 * B * S * F * F,
        transcendentals=B * head_num * S * S,
        bytes_accessed=4 * (4 * B * S * F + F * F + F + B * head_num * S * S),
    )
    kernel = functools.partial(_sdpa_oproj_kernel, scale=scale)
    return pl.pallas_call(
        kernel,
        out_shape=(
            jax.ShapeDtypeStruct((B, S, F), qp.dtype),
            jax.ShapeDtypeStruct((B, head_num, S, S), jnp.float32),
        ),
        grid=(B, n_q, head_num),  # head axis last = reduction axis for y
        in_specs=[
            pl.BlockSpec((1, TQ, D), lambda b, qi, h: (b, qi, h)),
            pl.BlockSpec((1, S, D), lambda b, qi, h: (b, 0, h)),
            pl.BlockSpec((1, S, D), lambda b, qi, h: (b, 0, h)),
            pl.BlockSpec((F, D), lambda b, qi, h: (0, h)),
            pl.BlockSpec((1, F), lambda b, qi, h: (0, 0)),
        ],
        out_specs=(
            pl.BlockSpec((1, TQ, F), lambda b, qi, h: (b, qi, 0)),   # resident over h
            pl.BlockSpec((1, 1, TQ, S), lambda b, qi, h: (b, h, qi, 0)),
        ),
        scratch_shapes=[pltpu.VMEM((TQ, F), jnp.float32)],
        compiler_params=pltpu.CompilerParams(
            dimension_semantics=("parallel", "parallel", "arbitrary"),
            vmem_limit_bytes=_VMEM_LIMIT,
        ),
        cost_estimate=cost,
    )(qp, kp, vp, wo, bo)


# ------------------- unfused SDPA (lane-unaligned fallback) -----------------

def _sdpa_kernel(q_ref, k_ref, v_ref, ctx_ref, attn_ref, *, scale):
    # q_ref: (1, TQ, D); k_ref/v_ref: (1, S, D); ctx_ref: (1, TQ, D); attn_ref: (1, 1, TQ, S)
    q = q_ref[0]
    k = k_ref[0]
    v = v_ref[0]
    s = lax.dot_general(
        q, k, dimension_numbers=(((1,), (1,)), ((), ())),
        preferred_element_type=jnp.float32,
    ) * jnp.float32(scale)
    s = s - jnp.max(s, axis=-1, keepdims=True)
    p = jnp.exp(s)
    attn = p * pl.reciprocal(jnp.sum(p, axis=-1, keepdims=True), approx=True)
    ctx = jnp.dot(attn.astype(v.dtype), v, preferred_element_type=jnp.float32)
    ctx_ref[0] = ctx.astype(ctx_ref.dtype)
    attn_ref[0, 0] = attn.astype(attn_ref.dtype)


def sdpa_heads(qp, kp, vp, head_num, *, q_tile=256):
    """Unfused SDPA over head column-slices (fallback path)."""
    B, S, F = qp.shape
    D = F // head_num
    TQ = _tile_size(S, q_tile)
    n_q = S // TQ
    scale = 1.0 / math.sqrt(D)

    cost = pl.CostEstimate(
        flops=4 * B * head_num * S * S * D,
        transcendentals=B * head_num * S * S,
        bytes_accessed=4 * (4 * B * S * F + B * head_num * S * S),
    )
    kernel = functools.partial(_sdpa_kernel, scale=scale)
    return pl.pallas_call(
        kernel,
        out_shape=(
            jax.ShapeDtypeStruct((B, S, F), qp.dtype),
            jax.ShapeDtypeStruct((B, head_num, S, S), jnp.float32),
        ),
        grid=(B, head_num, n_q),
        in_specs=[
            pl.BlockSpec((1, TQ, D), lambda b, h, qi: (b, qi, h)),
            pl.BlockSpec((1, S, D), lambda b, h, qi: (b, 0, h)),
            pl.BlockSpec((1, S, D), lambda b, h, qi: (b, 0, h)),
        ],
        out_specs=(
            pl.BlockSpec((1, TQ, D), lambda b, h, qi: (b, qi, h)),
            pl.BlockSpec((1, 1, TQ, S), lambda b, h, qi: (b, h, qi, 0)),
        ),
        compiler_params=pltpu.CompilerParams(
            dimension_semantics=("parallel", "parallel", "parallel"),
            vmem_limit_bytes=_VMEM_LIMIT,
        ),
        cost_estimate=cost,
    )(qp, kp, vp)


# ------------------------------ module wrapper ------------------------------

def init_mha_params(key, in_features):
    """Deterministic nn.Linear-style init: U(-1/sqrt(fan_in), 1/sqrt(fan_in))."""
    bound = 1.0 / math.sqrt(in_features)
    keys = jax.random.split(key, 8)

    def lin(kw, kb):
        w = jax.random.uniform(kw, (in_features, in_features), jnp.float32, -bound, bound)
        b = jax.random.uniform(kb, (1, in_features), jnp.float32, -bound, bound)
        return w, b

    wq, bq = lin(keys[0], keys[1])
    wk, bk = lin(keys[2], keys[3])
    wv, bv = lin(keys[4], keys[5])
    wo, bo = lin(keys[6], keys[7])
    return dict(wq=wq, bq=bq, wk=wk, bk=bk, wv=wv, bv=bv, wo=wo, bo=bo)


def multi_head_attention(q, k, v, params, head_num):
    """Equivalent of MultiHeadAttention.forward(q, k, v) with activation=relu."""
    B, S, F = q.shape
    assert F % head_num == 0
    D = F // head_num

    # projections + activation (Pallas, row-tiled)
    qp = linear_relu(q, params["wq"], params["bq"])
    kp = linear_relu(k, params["wk"], params["bk"])
    vp = linear_relu(v, params["wv"], params["bv"])

    if head_num == 1 or D % 128 == 0:
        # Fast path: head split/merge folded into BlockSpecs and the output
        # projection fused into the attention kernel (head axis = reduction).
        y, attn = sdpa_output_proj(qp, kp, vp, params["wo"], params["bo"], head_num)
    else:
        # TODO(synk): lane-unaligned head_dim (D % 128 != 0) falls back to JAX-side
        # head split; SDPA runs per (batch*head) and the output projection is a
        # separate Pallas linear+relu call.
        def tb(x):
            return x.reshape(B, S, head_num, D).transpose(0, 2, 1, 3).reshape(B * head_num, S, D)

        ctx_h, attn_h = sdpa_heads(tb(qp), tb(kp), tb(vp), 1)
        ctx = ctx_h.reshape(B, head_num, S, D).transpose(0, 2, 1, 3).reshape(B, S, F)
        attn = attn_h.reshape(B, head_num, S, S)
        y = linear_relu(ctx, params["wo"], params["bo"])

    return y, attn


# ------------------------------ reference (JAX) ------------------------------

def _reference(q, k, v, params, head_num):
    B, S, F = q.shape
    D = F // head_num
    relu = lambda x: jnp.maximum(x, 0.0)
    qp = relu(q @ params["wq"].T + params["bq"][0])
    kp = relu(k @ params["wk"].T + params["bk"][0])
    vp = relu(v @ params["wv"].T + params["bv"][0])

    def tb(x):
        return x.reshape(B, S, head_num, D).transpose(0, 2, 1, 3).reshape(B * head_num, S, D)

    qh, kh, vh = tb(qp), tb(kp), tb(vp)
    scores = jnp.einsum("bqd,bkd->bqk", qh, kh) / math.sqrt(D)
    attn = jax.nn.softmax(scores, axis=-1)
    ctx = jnp.einsum("bqk,bkd->bqd", attn, vh)
    y = ctx.reshape(B, head_num, S, D).transpose(0, 2, 1, 3).reshape(B, S, F)
    y = relu(y @ params["wo"].T + params["bo"][0])
    return y, attn.reshape(B, head_num, S, S)


# ----------------------------------- main -----------------------------------

if __name__ == "__main__":
    key = jax.random.PRNGKey(0)

    # (B, S, F, H): primary config exercises the fused, lane-aligned (D=128) path;
    # the second config exercises the lane-unaligned fallback path (D=8).
    configs = [(2, 16, 256, 2), (2, 8, 32, 4)]

    ok = True
    for B, S, F, H in configs:
        kq, kk, kv, kp, key = jax.random.split(key, 5)
        q = jax.random.normal(kq, (B, S, F), jnp.float32)
        k = jax.random.normal(kk, (B, S, F), jnp.float32)
        v = jax.random.normal(kv, (B, S, F), jnp.float32)
        params = init_mha_params(kp, F)

        y, attn = multi_head_attention(q, k, v, params, H)
        y = jax.block_until_ready(y)
        attn = jax.block_until_ready(attn)

        y_ref, attn_ref = _reference(q, k, v, params, H)
        assert y.shape == (B, S, F) and attn.shape == (B, H, S, S)
        # tolerance 2e-3: the softmax denominator uses the EUP approximate reciprocal
        # (~2^-12 relative error).
        ok &= bool(jnp.allclose(y, y_ref, atol=2e-3, rtol=2e-3))
        ok &= bool(jnp.allclose(attn, attn_ref, atol=2e-3, rtol=2e-3))

    assert ok
    print("KERNEL_OK")
</pallas_src>

<mosaic_0001>
module attributes {stable_mosaic.version = 11 : i64} {
  func.func @_linear_relu_kernel(%arg0: i32, %arg1: memref<32x256xf32, #tpu.memory_space<vmem>>, %arg2: memref<256x256xf32, #tpu.memory_space<vmem>>, %arg3: memref<1x256xf32, #tpu.memory_space<vmem>>, %arg4: memref<32x256xf32, #tpu.memory_space<vmem>>) attributes {dimension_semantics = [#tpu.dimension_semantics<parallel>], iteration_bounds = array<i64: 1>, scalar_prefetch = 0 : i64, scratch_operands = 0 : i64, tpu.core_type = #tpu.core_type<tc>, window_params = [{transform_indices = @transform_0, window_bounds = array<i64: 32, 256>}, {pipeline_mode = #tpu.pipeline_mode<synchronous>, transform_indices = @transform_1, window_bounds = array<i64: 256, 256>}, {pipeline_mode = #tpu.pipeline_mode<synchronous>, transform_indices = @transform_2, window_bounds = array<i64: 1, 256>}, {transform_indices = @transform_3, window_bounds = array<i64: 32, 256>}]} {
    %c0 = arith.constant 0 : index
    %c0_0 = arith.constant 0 : index
    %0 = vector.load %arg1[%c0, %c0_0] : memref<32x256xf32, #tpu.memory_space<vmem>>, vector<32x256xf32>
    %c0_1 = arith.constant 0 : index
    %c0_2 = arith.constant 0 : index
    %1 = vector.load %arg2[%c0_1, %c0_2] : memref<256x256xf32, #tpu.memory_space<vmem>>, vector<256x256xf32>
    %cst = arith.constant dense<0.000000e+00> : vector<32x256xf32>
    %2 = tpu.matmul %0, %1, %cst {dimension_numbers = #tpu.dot_dimension_numbers<[1], [1], [0], [0], [0, 0, 1, 0], [], []>} : vector<32x256xf32>, vector<256x256xf32>, vector<32x256xf32> -> vector<32x256xf32>
    %c0_3 = arith.constant 0 : index
    %c0_4 = arith.constant 0 : index
    %3 = vector.load %arg3[%c0_3, %c0_4] : memref<1x256xf32, #tpu.memory_space<vmem>>, vector<1x256xf32>
    %4 = vector.broadcast %3 : vector<1x256xf32> to vector<32x256xf32>
    %5 = arith.addf %2, %4 : vector<32x256xf32>
    %cst_5 = arith.constant 0.000000e+00 : f32
    %6 = vector.broadcast %cst_5 : f32 to vector<32x256xf32>
    %7 = arith.maximumf %5, %6 : vector<32x256xf32>
    %c0_6 = arith.constant 0 : index
    %c0_7 = arith.constant 0 : index
    %8 = vector.load %arg4[%c0_6, %c0_7] : memref<32x256xf32, #tpu.memory_space<vmem>>, vector<32x256xf32>
    tpu.vector_store %arg4[%c0_6, %c0_7], %7 {strides = array<i32>} : memref<32x256xf32, #tpu.memory_space<vmem>>, vector<32x256xf32>,
    return
  }
  func.func @transform_0(%arg0: i32) -> (i32, i32) {
    %c0_i32 = arith.constant 0 : i32
    %c0_i32_0 = arith.constant 0 : i32
    return %arg0, %c0_i32 : i32, i32
  }
  func.func @transform_1(%arg0: i32) -> (i32, i32) {
    %c0_i32 = arith.constant 0 : i32
    %c0_i32_0 = arith.constant 0 : i32
    %c0_i32_1 = arith.constant 0 : i32
    return %c0_i32, %c0_i32_0 : i32, i32
  }
  func.func @transform_2(%arg0: i32) -> (i32, i32) {
    %c0_i32 = arith.constant 0 : i32
    %c0_i32_0 = arith.constant 0 : i32
    %c0_i32_1 = arith.constant 0 : i32
    return %c0_i32, %c0_i32_0 : i32, i32
  }
  func.func @transform_3(%arg0: i32) -> (i32, i32) {
    %c0_i32 = arith.constant 0 : i32
    %c0_i32_0 = arith.constant 0 : i32
    return %arg0, %c0_i32 : i32, i32
  }
}

</mosaic_0001>

<llo_original>
// kernel: tpu_custom_call.1
$region0: #{tpu_custom_call.1}
  #allocation0 [shape = 'u32[]', space=smem, size = 0x4, offset = 0x4, fixed_abs, tag = 'smem constant byte address 0x4 - core index']
  #allocation1 [shape = 'u32[144,128]{1,0:T(1,128)}', space=vmem, size = 0x12000, scoped, tag = 'internal scratch']
  %s0 = inlined_call_operand.hbm [shape: f32[32,256], index: 0, kind: input, shape index: {}]
  %s1 = inlined_call_operand.hbm [shape: f32[256,256], index: 1, kind: input, shape index: {}]
  %s2 = inlined_call_operand.vmem [shape: f32[1,256], index: 2, kind: input, shape index: {}]
  %s3 = inlined_call_operand.hbm [shape: f32[32,256], index: 3, kind: output, shape index: {}]
  %s4 = sld [smem:[#allocation0]]
  $region30: #{tpu_custom_call.1} parent=0
    _
  %s6 = ssub.s32 1, %s4
  %s7 = scalar_select 0, %s6, %s4
  $region1: #{tpu_custom_call.1} parent=0
    #allocation2 [shape = 'u8[32768]{0}', space=vmem, size = 0x8000, scoped, tag = 'input window, operand 0, single buffered']
    #allocation3 [shape = 's32[1]{0}', space=sflag, size = 0x4, scoped, tag = 'scoped memory for tpu_custom_call.1']
    #allocation4 [shape = 's32[1]{0}', space=sflag, size = 0x4, scoped, tag = 'scoped memory for tpu_custom_call.1']
    #allocation5 [shape = 'u8[262144]{0}', space=vmem, size = 0x40000, scoped, tag = 'input window, operand 1, single buffered']
    #allocation6 [shape = 's32[1]{0}', space=sflag, size = 0x4, scoped, tag = 'scoped memory for tpu_custom_call.1']
    #allocation7 [shape = 'u8[32768]{0}', space=vmem, size = 0x8000, scoped, tag = 'output window, operand 0, single buffered']
    %8 = vsyncpa [#allocation3], 0
    %9 = vsyncpa [#allocation6], 0
    %10 = vsyncpa [#allocation4], 0
    // Predicated region
    $region2: #{tpu_custom_call.1} parent=1 // pred_check
      _
    $region3: #{tpu_custom_call.1} parent=1 // pred_check_branch
      %12 = sbr.rel (0) target = $region5
    $region4: #{tpu_custom_call.1} parent=1 // pred_region
      %s14 = ssub.s32 1024, 1024
      %15 = vsyncadd [#allocation3], %s14
      %s16 = sshll.u32 [#allocation2], 4
      %s17 = int_to_ptr.vmem [resolvable:$true] %s16
      %22 = dma.hbm_to_vmem [thread:$0]  %s0, 1024, %s17, [#allocation3], 256, 256, 16
    $region5: #{tpu_custom_call.1} parent=1 // pred_fallthru
      _
    // Predicated region
    $region6: #{tpu_custom_call.1} parent=1 // pred_check
      _
    $region7: #{tpu_custom_call.1} parent=1 // pred_check_branch
      %24 = sbr.rel (0) target = $region9
    $region8: #{tpu_custom_call.1} parent=1 // pred_region
      %s26 = ssub.s32 8192, 8192
      %27 = vsyncadd [#allocation6], %s26
      %s28 = sshll.u32 [#allocation5], 4
      %s29 = int_to_ptr.vmem [resolvable:$true] %s28
      %34 = dma.hbm_to_vmem [thread:$0]  %s1, 8192, %s29, [#allocation6], 256, 256, 16
    $region9: #{tpu_custom_call.1} parent=1 // pred_fallthru
      _
    // Predicated region
    $region10: #{tpu_custom_call.1} parent=1 // pred_check
      _
    $region11: #{tpu_custom_call.1} parent=1 // pred_check_branch
      %36 = sbr.rel (0) target = $region13
    $region12: #{tpu_custom_call.1} parent=1 // pred_region
      _
    $region13: #{tpu_custom_call.1} parent=1 // pred_fallthru
      _
    // Predicated region
    $region14: #{tpu_custom_call.1} parent=1 // pred_check
      _
    $region15: #{tpu_custom_call.1} parent=1 // pred_check_branch
      %38 = sbr.rel (0) target = $region17
    $region16: #{tpu_custom_call.1} parent=1 // pred_region
      %39 = dma.done [#allocation3], 1024
    $region17: #{tpu_custom_call.1} parent=1 // pred_fallthru
      _
    // Predicated region
    $region18: #{tpu_custom_call.1} parent=1 // pred_check
      _
    $region19: #{tpu_custom_call.1} parent=1 // pred_check_branch
      %41 = sbr.rel (0) target = $region21
    $region20: #{tpu_custom_call.1} parent=1 // pred_region
      %42 = dma.done [#allocation6], 8192
    $region21: #{tpu_custom_call.1} parent=1 // pred_fallthru
      _
    %v43 = vld [vmem:[#allocation2] sm:$0xff]
    %v44 = vld [vmem:[#allocation2 + $0x8] sm:$0xff]
    %v45 = vld [vmem:[#allocation2 + $0x10] sm:$0xff]
    %v46 = vld [vmem:[#allocation2 + $0x18] sm:$0xff]
    %v47 = vld [vmem:[#allocation2 + $0x20] sm:$0xff]
    %v48 = vld [vmem:[#allocation2 + $0x28] sm:$0xff]
    %v49 = vld [vmem:[#allocation2 + $0x30] sm:$0xff]
    %v50 = vld [vmem:[#allocation2 + $0x38] sm:$0xff]
    %v51 = vld [vmem:[#allocation5] sm:$0xff]
    %v52 = vld [vmem:[#allocation5 + $0x8] sm:$0xff]
    %v53 = vld [vmem:[#allocation5 + $0x10] sm:$0xff]
    %v54 = vld [vmem:[#allocation5 + $0x18] sm:$0xff]
    %v55 = vld [vmem:[#allocation5 + $0x20] sm:$0xff]
    %v56 = vld [vmem:[#allocation5 + $0x28] sm:$0xff]
    %v57 = vld [vmem:[#allocation5 + $0x30] sm:$0xff]
    %v58 = vld [vmem:[#allocation5 + $0x38] sm:$0xff]
    %v59 = vld [vmem:[#allocation5 + $0x40] sm:$0xff]
    %v60 = vld [vmem:[#allocation5 + $0x48] sm:$0xff]
    %v61 = vld [vmem:[#allocation5 + $0x50] sm:$0xff]
    %v62 = vld [vmem:[#allocation5 + $0x58] sm:$0xff]
    %v63 = vld [vmem:[#allocation5 + $0x60] sm:$0xff]
    %v64 = vld [vmem:[#allocation5 + $0x68] sm:$0xff]
    %v65 = vld [vmem:[#allocation5 + $0x70] sm:$0xff]
    %v66 = vld [vmem:[#allocation5 + $0x78] sm:$0xff]
    %v67 = vld [vmem:[#allocation5 + $0x80] sm:$0xff]
    %v68 = vld [vmem:[#allocation5 + $0x88] sm:$0xff]
    %v69 = vld [vmem:[#allocation5 + $0x90] sm:$0xff]
    %v70 = vld [vmem:[#allocation5 + $0x98] sm:$0xff]
    %v71 = vld [vmem:[#allocation5 + $0xa0] sm:$0xff]
    %v72 = vld [vmem:[#allocation5 + $0xa8] sm:$0xff]
    %v73 = vld [vmem:[#allocation5 + $0xb0] sm:$0xff]
    %v74 = vld [vmem:[#allocation5 + $0xb8] sm:$0xff]
    %v75 = vld [vmem:[#allocation5 + $0xc0] sm:$0xff]
    %v76 = vld [vmem:[#allocation5 + $0xc8] sm:$0xff]
    %v77 = vld [vmem:[#allocation5 + $0xd0] sm:$0xff]
    %v78 = vld [vmem:[#allocation5 + $0xd8] sm:$0xff]
    %v79 = vld [vmem:[#allocation5 + $0xe0] sm:$0xff]
    %v80 = vld [vmem:[#allocation5 + $0xe8] sm:$0xff]
    %v81 = vld [vmem:[#allocation5 + $0xf0] sm:$0xff]
    %v82 = vld [vmem:[#allocation5 + $0xf8] sm:$0xff]
    %v83 = vld [vmem:[#allocation5 + $0x100] sm:$0xff]
    %v84 = vld [vmem:[#allocation5 + $0x108] sm:$0xff]
    %v85 = vld [vmem:[#allocation5 + $0x110] sm:$0xff]
    %v86 = vld [vmem:[#allocation5 + $0x118] sm:$0xff]
    %v87 = vld [vmem:[#allocation5 + $0x120] sm:$0xff]
    %v88 = vld [vmem:[#allocation5 + $0x128] sm:$0xff]
    %v89 = vld [vmem:[#allocation5 + $0x130] sm:$0xff]
    %v90 = vld [vmem:[#allocation5 + $0x138] sm:$0xff]
    %v91 = vld [vmem:[#allocation5 + $0x140] sm:$0xff]
    %v92 = vld [vmem:[#allocation5 + $0x148] sm:$0xff]
    %v93 = vld [vmem:[#allocation5 + $0x150] sm:$0xff]
    %v94 = vld [vmem:[#allocation5 + $0x158] sm:$0xff]
    %v95 = vld [vmem:[#allocation5 + $0x160] sm:$0xff]
    %v96 = vld [vmem:[#allocation5 + $0x168] sm:$0xff]
    %v97 = vld [vmem:[#allocation5 + $0x170] sm:$0xff]
    %v98 = vld [vmem:[#allocation5 + $0x178] sm:$0xff]
    %v99 = vld [vmem:[#allocation5 + $0x180] sm:$0xff]
    %v100 = vld [vmem:[#allocation5 + $0x188] sm:$0xff]
    %v101 = vld [vmem:[#allocation5 + $0x190] sm:$0xff]
    %v102 = vld [vmem:[#allocation5 + $0x198] sm:$0xff]
    %v103 = vld [vmem:[#allocation5 + $0x1a0] sm:$0xff]
    %v104 = vld [vmem:[#allocation5 + $0x1a8] sm:$0xff]
    %v105 = vld [vmem:[#allocation5 + $0x1b0] sm:$0xff]
    %v106 = vld [vmem:[#allocation5 + $0x1b8] sm:$0xff]
    %v107 = vld [vmem:[#allocation5 + $0x1c0] sm:$0xff]
    %v108 = vld [vmem:[#allocation5 + $0x1c8] sm:$0xff]
    %v109 = vld [vmem:[#allocation5 + $0x1d0] sm:$0xff]
    %v110 = vld [vmem:[#allocation5 + $0x1d8] sm:$0xff]
    %v111 = vld [vmem:[#allocation5 + $0x1e0] sm:$0xff]
    %v112 = vld [vmem:[#allocation5 + $0x1e8] sm:$0xff]
    %v113 = vld [vmem:[#allocation5 + $0x1f0] sm:$0xff]
    %v114 = vld [vmem:[#allocation5 + $0x1f8] sm:$0xff]
    %v115 = vld [vmem:[%s2] sm:$0x3]
    %v117 = vlaneseq
    %v118 = vshrl.u32 %v117, 7
    %v119 = vsub.s32 0, %v118
    %v120 = vrot.slane %v115, %v119
    %v121 = vlaneseq
    %v122 = vshrl.u32 %v121, 7
    %v123 = vsub.s32 1, %v122
    %v124 = vrot.slane %v115, %v123
    %127 = vmatprep.subr.mxu0 %v52
    %128 = vmatpush1.xpose.msra.mxu0 %v51
    %129 = vmatprep.subr.mxu0 %v54
    %130 = vmatpush1.xpose.msra.mxu0 %v53
    %131 = vmatprep.subr.mxu0 %v56
    %132 = vmatpush1.xpose.msra.mxu0 %v55
    %133 = vmatprep.subr.mxu0 %v58
    %134 = vmatpush1.xpose.msra.mxu0 %v57
    %135 = vmatprep.subr.mxu0 %v60
    %136 = vmatpush1.xpose.msra.mxu0 %v59
    %137 = vmatprep.subr.mxu0 %v62
    %138 = vmatpush1.xpose.msra.mxu0 %v61
    %139 = vmatprep.subr.mxu0 %v64
    %140 = vmatpush1.xpose.msra.mxu0 %v63
    %141 = vmatprep.subr.mxu0 %v66
    %142 = vmatpush1.xpose.msra.mxu0 %v65
    %143 = vmatprep.subr.mxu0 %v68
    %144 = vmatpush1.xpose.msra.mxu0 %v67
    %145 = vmatprep.subr.mxu0 %v70
    %146 = vmatpush1.xpose.msra.mxu0 %v69
    %147 = vmatprep.subr.mxu0 %v72
    %148 = vmatpush1.xpose.msra.mxu0 %v71
    %149 = vmatprep.subr.mxu0 %v74
    %150 = vmatpush1.xpose.msra.mxu0 %v73
    %151 = vmatprep.subr.mxu0 %v76
    %152 = vmatpush1.xpose.msra.mxu0 %v75
    %153 = vmatprep.subr.mxu0 %v78
    %154 = vmatpush1.xpose.msra.mxu0 %v77
    %155 = vmatprep.subr.mxu0 %v80
    %156 = vmatpush1.xpose.msra.mxu0 %v79
    %157 = vmatprep.subr.mxu0 %v82
    %158 = vmatpush1.xpose.msra.mxu0 %v81
    %159 = vmatprep.subr.mxu0 %v84
    %160 = vmatpush1.xpose.msra.mxu0 %v83
    %161 = vmatprep.subr.mxu0 %v86
    %162 = vmatpush1.xpose.msra.mxu0 %v85
    %163 = vmatprep.subr.mxu0 %v88
    %164 = vmatpush1.xpose.msra.mxu0 %v87
    %165 = vmatprep.subr.mxu0 %v90
    %166 = vmatpush1.xpose.msra.mxu0 %v89
    %167 = vmatprep.subr.mxu0 %v92
    %168 = vmatpush1.xpose.msra.mxu0 %v91
    %169 = vmatprep.subr.mxu0 %v94
    %170 = vmatpush1.xpose.msra.mxu0 %v93
    %171 = vmatprep.subr.mxu0 %v96
    %172 = vmatpush1.xpose.msra.mxu0 %v95
    %173 = vmatprep.subr.mxu0 %v98
    %174 = vmatpush1.xpose.msra.mxu0 %v97
    %175 = vmatprep.subr.mxu0 %v100
    %176 = vmatpush1.xpose.msra.mxu0 %v99
    %177 = vmatprep.subr.mxu0 %v102
    %178 = vmatpush1.xpose.msra.mxu0 %v101
    %179 = vmatprep.subr.mxu0 %v104
    %180 = vmatpush1.xpose.msra.mxu0 %v103
    %181 = vmatprep.subr.mxu0 %v106
    %182 = vmatpush1.xpose.msra.mxu0 %v105
    %183 = vmatprep.subr.mxu0 %v108
    %184 = vmatpush1.xpose.msra.mxu0 %v107
    %185 = vmatprep.subr.mxu0 %v110
    %186 = vmatpush1.xpose.msra.mxu0 %v109
    %187 = vmatprep.subr.mxu0 %v112
    %188 = vmatpush1.xpose.msra.mxu0 %v111
    %189 = vmatprep.subr.mxu0 %v114
    %190 = vmatpush1.xpose.msra.mxu0 %v113
    %191 = vmatprep.mubr.f32.mxu0 %v44
    %192 = vmatmul.mubr.f32.gmra.mrb[0].mxu0 %v43
    %v193 = vpop.f32.mrb[0].mxu0
    %v194 = vadd.f32 %v120, %v193
    %v195 = vpop.f32.mrb[0].mxu0
    %v196 = vadd.f32 %v124, %v195
    %197 = vmatprep.mubr.f32.mxu0 %v46
    %198 = vmatmul.mubr.f32.gmra.mrb[0].mxu0 %v45
    %v199 = vpop.f32.mrb[0].mxu0
    %v200 = vadd.f32 %v120, %v199
    %v201 = vpop.f32.mrb[0].mxu0
    %v202 = vadd.f32 %v124, %v201
    %203 = vmatprep.mubr.f32.mxu0 %v48
    %204 = vmatmul.mubr.f32.gmra.mrb[0].mxu0 %v47
    %v205 = vpop.f32.mrb[0].mxu0
    %v206 = vadd.f32 %v120, %v205
    %v207 = vpop.f32.mrb[0].mxu0
    %v208 = vadd.f32 %v124, %v207
    %209 = vmatprep.mubr.f32.mxu0 %v50
    %210 = vmatmul.mubr.f32.gmra.mrb[0].mxu0 %v49
    %v211 = vpop.f32.mrb[0].mxu0
    %v212 = vadd.f32 %v120, %v211
    %v213 = vpop.f32.mrb[0].mxu0
    %v214 = vadd.f32 %v124, %v213
    %215 = vdwg.mxu0
    %v216 = vmax.f32 %v194, 0.0
    %v217 = vmax.f32 %v196, 0.0
    %v218 = vmax.f32 %v200, 0.0
    %v219 = vmax.f32 %v202, 0.0
    %v220 = vmax.f32 %v206, 0.0
    %v221 = vmax.f32 %v208, 0.0
    %v222 = vmax.f32 %v212, 0.0
    %v223 = vmax.f32 %v214, 0.0
    %224 = vst [vmem:[#allocation7] sm:$0xff] %v216
    %225 = vst [vmem:[#allocation7 + $0x8] sm:$0xff] %v217
    %226 = vst [vmem:[#allocation7 + $0x10] sm:$0xff] %v218
    %227 = vst [vmem:[#allocation7 + $0x18] sm:$0xff] %v219
    %228 = vst [vmem:[#allocation7 + $0x20] sm:$0xff] %v220
    %229 = vst [vmem:[#allocation7 + $0x28] sm:$0xff] %v221
    %230 = vst [vmem:[#allocation7 + $0x30] sm:$0xff] %v222
    %231 = vst [vmem:[#allocation7 + $0x38] sm:$0xff] %v223
    // Predicated region
    $region22: #{tpu_custom_call.1} parent=1 // pred_check
      _
    $region23: #{tpu_custom_call.1} parent=1 // pred_check_branch
      %233 = sbr.rel (0) target = $region25
    $region24: #{tpu_custom_call.1} parent=1 // pred_region
      %s235 = ssub.s32 1024, 1024
      %236 = vsyncadd [#allocation4], %s235
      %s237 = sshll.u32 [#allocation7], 4
      %s238 = int_to_ptr.vmem [resolvable:$true] %s237
      %243 = dma.vmem_to_hbm [thread:$0]  %s238, 1024, %s3, [#allocation4], 256, 256, 16
    $region25: #{tpu_custom_call.1} parent=1 // pred_fallthru
      _
    // Predicated region
    $region26: #{tpu_custom_call.1} parent=1 // pred_check
      _
    $region27: #{tpu_custom_call.1} parent=1 // pred_check_branch
      %245 = sbr.rel (0) target = $region29
    $region28: #{tpu_custom_call.1} parent=1 // pred_region
      %246 = dma.done [#allocation4], 1024
    $region29: #{tpu_custom_call.1} parent=1 // pred_fallthru
      _
    %247 = vsyncpa [#allocation3], 1
    %248 = vsyncpa [#allocation6], 1
    %249 = vsyncpa [#allocation4], 1

</llo_original>
